<compile_context>
chip_gen: v7x
topology: tpu7x:2x2x1
jax: 0.10.0
libtpu: 0.0.40
codegen_flags: <defaults>
</compile_context>

<pallas_src>
import jax
import jax.numpy as jnp
from jax.experimental import pallas as pl
from jax.experimental.pallas import tpu as pltpu


def _round_up(x, m):
    return ((x + m - 1) // m) * m


def neumf_kernel(u_ref, m_ref,
                 w1u_ref, w1m_ref, b1_ref, w2_ref, b2_ref,
                 wf_gmf_ref, wf_mlp_ref, bf_ref,
                 out_ref):
    f32 = jnp.float32
    bf16 = jnp.bfloat16
    E = w1u_ref.shape[1]

    u = u_ref[...]                                   # (2E, TB) bf16, rows [0:E]=gmf, [E:2E]=mlp
    m = m_ref[...]                                   # (2E, TB) bf16

    # GMF branch: lane-dense elementwise product, f32 on the VPU (v5e-safe).
    gmf = u[:E, :].astype(f32) * m[:E, :].astype(f32)            # (E, TB)

    # MLP layer 1: feature-major, two K=E bf16 matmuls (no concat needed).
    h = (jnp.dot(w1u_ref[...], u[E:, :], preferred_element_type=f32)
         + jnp.dot(w1m_ref[...], m[E:, :], preferred_element_type=f32))   # (L1, TB)
    h = jnp.maximum(h + b1_ref[...], 0.0)

    # MLP layer 2: bf16 MXU operands, f32 accumulation.
    h = jnp.dot(w2_ref[...], h.astype(bf16), preferred_element_type=f32)  # (L2, TB)
    h = jnp.maximum(h + b2_ref[...], 0.0)

    # Final head: (1,E)@(E,TB) + (1,L2)@(L2,TB) + bias -> (1, TB), lane-major,
    # goes straight to the unmasked full-lane store.
    pred = (jnp.dot(wf_gmf_ref[...], gmf.astype(bf16), preferred_element_type=f32)
            + jnp.dot(wf_mlp_ref[...], h.astype(bf16), preferred_element_type=f32)
            + bf_ref[...])                                                # (1, TB)

    out_ref[...] = pred.reshape(out_ref.shape)


def neumf_forward(params, user_ids, movie_ids, *, block_b=2048):
    B = user_ids.shape[0]
    E = params["user_emb"].shape[1] // 2
    L1 = params["w1u_t"].shape[0]
    L2 = params["w2_t"].shape[0]

    # Batch tile: multiple of 128 lanes (lane-dense stores, aligned MXU tiles),
    # capped at block_b, and chosen so nt >= 2 whenever B >= 256 so both v7x
    # TensorCores get work through the "parallel" grid axis.
    TB = min(block_b, max(128, _round_up(-(-B // 2), 128)))
    B_pad = _round_up(B, TB)
    nt = B_pad // TB

    if B_pad != B:
        pad = B_pad - B
        user_ids = jnp.concatenate([user_ids, jnp.zeros((pad,), user_ids.dtype)])
        movie_ids = jnp.concatenate([movie_ids, jnp.zeros((pad,), movie_ids.dtype)])

    # --- XLA glue: ONE gather per id on the fused (N, 2E) tables, then a
    # feature-major transpose so the kernel sees (2E, B_pad) slabs. -----------
    u_slab = params["user_emb"][user_ids].T          # (2E, B_pad) bf16
    m_slab = params["movie_emb"][movie_ids].T        # (2E, B_pad) bf16

    act = pl.BlockSpec((2 * E, TB), lambda i: (0, i))        # streamed per tile
    res = lambda shape: pl.BlockSpec(shape, lambda i: (0, 0))  # resident weights

    out = pl.pallas_call(
        neumf_kernel,
        out_shape=jax.ShapeDtypeStruct((nt, 1, TB), jnp.float32),
        grid=(nt,),
        in_specs=[act, act,
                  res((L1, E)), res((L1, E)), res((L1, 1)),
                  res((L2, L1)), res((L2, 1)),
                  res((1, E)), res((1, L2)), res((1, 1))],
        out_specs=pl.BlockSpec((1, 1, TB), lambda i: (i, 0, 0)),
        compiler_params=pltpu.CompilerParams(
            dimension_semantics=("parallel",)),
    )(u_slab, m_slab,
      params["w1u_t"], params["w1m_t"], params["b1"],
      params["w2_t"], params["b2"],
      params["wf_gmf_row"], params["wf_mlp_row"], params["bf"])

    return out.reshape(B_pad)[:B]          # matches predictions.squeeze()


def init_params(key, num_users, num_movies, embedding_dim, mlp_layers=(64, 32)):
    # bf16 tables / weight matrices (bandwidth), f32 biases (tiny).
    ks = jax.random.split(key, 11)
    E = embedding_dim
    L1, L2 = mlp_layers
    s = 0.1
    bf16, f32 = jnp.bfloat16, jnp.float32

    def rnd(k, shape, dtype):
        return (s * jax.random.normal(k, shape, jnp.float32)).astype(dtype)

    # Fused per-entity embedding tables: columns [0:E]=GMF half, [E:2E]=MLP half.
    user_emb = jnp.concatenate([rnd(ks[0], (num_users, E), bf16),
                                rnd(ks[2], (num_users, E), bf16)], axis=1)
    movie_emb = jnp.concatenate([rnd(ks[1], (num_movies, E), bf16),
                                 rnd(ks[3], (num_movies, E), bf16)], axis=1)

    # Linear(2E -> L1), stored transposed (L1, 2E) and split into halves that
    # act on the user-MLP / movie-MLP embedding (feature-major compute).
    w1_t = rnd(ks[4], (L1, 2 * E), bf16)

    return {
        "user_emb": user_emb,
        "movie_emb": movie_emb,
        "w1u_t": w1_t[:, :E],                    # (L1, E)
        "w1m_t": w1_t[:, E:],                    # (L1, E)
        "b1": rnd(ks[5], (L1, 1), f32),
        "w2_t": rnd(ks[6], (L2, L1), bf16),      # Linear(L1 -> L2), transposed
        "b2": rnd(ks[7], (L2, 1), f32),
        # Final Linear(E + L2 -> 1), split into the GMF / MLP row pieces.
        "wf_gmf_row": rnd(ks[8], (1, E), bf16),
        "wf_mlp_row": rnd(ks[9], (1, L2), bf16),
        "bf": rnd(ks[10], (1, 1), f32),
    }


def neumf_reference(params, user_ids, movie_ids):
    """Pure-JAX (f32) reference mirroring the PyTorch forward exactly."""
    f32 = jnp.float32
    E = params["user_emb"].shape[1] // 2
    u = params["user_emb"][user_ids].astype(f32)        # (B, 2E)
    m = params["movie_emb"][movie_ids].astype(f32)      # (B, 2E)
    gmf = u[:, :E] * m[:, :E]
    x = jnp.concatenate([u[:, E:], m[:, E:]], axis=1)   # (B, 2E)
    w1 = jnp.concatenate([params["w1u_t"], params["w1m_t"]], axis=1).astype(f32).T
    x = jnp.maximum(x @ w1 + params["b1"].astype(f32).T, 0.0)
    x = jnp.maximum(x @ params["w2_t"].astype(f32).T + params["b2"].astype(f32).T, 0.0)
    comb = jnp.concatenate([gmf, x], axis=1)
    wf = jnp.concatenate([params["wf_gmf_row"], params["wf_mlp_row"]],
                         axis=1).astype(f32)             # (1, E+L2)
    return jnp.squeeze(comb @ wf.T + params["bf"], axis=-1)


if __name__ == "__main__":
    num_users, num_movies = 100, 200
    embedding_dim = 16
    batch = 8

    key = jax.random.PRNGKey(0)
    pkey, ukey, mkey = jax.random.split(key, 3)
    params = init_params(pkey, num_users, num_movies, embedding_dim)

    user_ids = jax.random.randint(ukey, (batch,), 0, num_users, dtype=jnp.int32)
    movie_ids = jax.random.randint(mkey, (batch,), 0, num_movies, dtype=jnp.int32)

    preds = jax.jit(neumf_forward)(params, user_ids, movie_ids)
    jax.block_until_ready(preds)

    ref = neumf_reference(params, user_ids, movie_ids)
    assert preds.shape == (batch,), preds.shape
    assert jnp.allclose(preds, ref, atol=1e-2, rtol=1e-2), (preds, ref)

    print("KERNEL_OK")
</pallas_src>

<mosaic_0001>
module attributes {stable_mosaic.version = 11 : i64} {
  func.func @neumf_kernel(%arg0: i32, %arg1: memref<32x128xbf16, #tpu.memory_space<vmem>>, %arg2: memref<32x128xbf16, #tpu.memory_space<vmem>>, %arg3: memref<64x16xbf16, #tpu.memory_space<vmem>>, %arg4: memref<64x16xbf16, #tpu.memory_space<vmem>>, %arg5: memref<64x1xf32, #tpu.memory_space<vmem>>, %arg6: memref<32x64xbf16, #tpu.memory_space<vmem>>, %arg7: memref<32x1xf32, #tpu.memory_space<vmem>>, %arg8: memref<1x16xbf16, #tpu.memory_space<vmem>>, %arg9: memref<1x32xbf16, #tpu.memory_space<vmem>>, %arg10: memref<1x1xf32, #tpu.memory_space<vmem>>, %arg11: memref<1x1x128xf32, #tpu.memory_space<vmem>>) attributes {dimension_semantics = [#tpu.dimension_semantics<parallel>], iteration_bounds = array<i64: 1>, scalar_prefetch = 0 : i64, scratch_operands = 0 : i64, tpu.core_type = #tpu.core_type<tc>, window_params = [{transform_indices = @transform_0, window_bounds = array<i64: 32, 128>}, {transform_indices = @transform_1, window_bounds = array<i64: 32, 128>}, {pipeline_mode = #tpu.pipeline_mode<synchronous>, transform_indices = @transform_2, window_bounds = array<i64: 64, 16>}, {pipeline_mode = #tpu.pipeline_mode<synchronous>, transform_indices = @transform_3, window_bounds = array<i64: 64, 16>}, {pipeline_mode = #tpu.pipeline_mode<synchronous>, transform_indices = @transform_4, window_bounds = array<i64: 64, 1>}, {pipeline_mode = #tpu.pipeline_mode<synchronous>, transform_indices = @transform_5, window_bounds = array<i64: 32, 64>}, {pipeline_mode = #tpu.pipeline_mode<synchronous>, transform_indices = @transform_6, window_bounds = array<i64: 32, 1>}, {pipeline_mode = #tpu.pipeline_mode<synchronous>, transform_indices = @transform_7, window_bounds = array<i64: 1, 16>}, {pipeline_mode = #tpu.pipeline_mode<synchronous>, transform_indices = @transform_8, window_bounds = array<i64: 1, 32>}, {pipeline_mode = #tpu.pipeline_mode<synchronous>, transform_indices = @transform_9, window_bounds = array<i64: 1, 1>}, {transform_indices = @transform_10, window_bounds = array<i64: 1, 1, 128>}]} {
    %c0 = arith.constant 0 : index
    %c0_0 = arith.constant 0 : index
    %0 = vector.load %arg1[%c0, %c0_0] : memref<32x128xbf16, #tpu.memory_space<vmem>>, vector<32x128xbf16>
    %c0_1 = arith.constant 0 : index
    %c0_2 = arith.constant 0 : index
    %1 = vector.load %arg2[%c0_1, %c0_2] : memref<32x128xbf16, #tpu.memory_space<vmem>>, vector<32x128xbf16>
    %2 = vector.extract_strided_slice %0 {offsets = [0, 0], sizes = [16, 128], strides = [1, 1]} : vector<32x128xbf16> to vector<16x128xbf16>
    %3 = arith.extf %2 : vector<16x128xbf16> to vector<16x128xf32>
    %4 = vector.extract_strided_slice %1 {offsets = [0, 0], sizes = [16, 128], strides = [1, 1]} : vector<32x128xbf16> to vector<16x128xbf16>
    %5 = arith.extf %4 : vector<16x128xbf16> to vector<16x128xf32>
    %6 = arith.mulf %3, %5 : vector<16x128xf32>
    %c0_3 = arith.constant 0 : index
    %c0_4 = arith.constant 0 : index
    %7 = vector.load %arg3[%c0_3, %c0_4] : memref<64x16xbf16, #tpu.memory_space<vmem>>, vector<64x16xbf16>
    %8 = vector.extract_strided_slice %0 {offsets = [16, 0], sizes = [16, 128], strides = [1, 1]} : vector<32x128xbf16> to vector<16x128xbf16>
    %cst = arith.constant dense<0.000000e+00> : vector<64x128xf32>
    %9 = tpu.matmul %7, %8, %cst {dimension_numbers = #tpu.dot_dimension_numbers<[1], [0], [0], [1], [0, 0, 1, 1], [], []>} : vector<64x16xbf16>, vector<16x128xbf16>, vector<64x128xf32> -> vector<64x128xf32>
    %c0_5 = arith.constant 0 : index
    %c0_6 = arith.constant 0 : index
    %10 = vector.load %arg4[%c0_5, %c0_6] : memref<64x16xbf16, #tpu.memory_space<vmem>>, vector<64x16xbf16>
    %11 = vector.extract_strided_slice %1 {offsets = [16, 0], sizes = [16, 128], strides = [1, 1]} : vector<32x128xbf16> to vector<16x128xbf16>
    %cst_7 = arith.constant dense<0.000000e+00> : vector<64x128xf32>
    %12 = tpu.matmul %10, %11, %cst_7 {dimension_numbers = #tpu.dot_dimension_numbers<[1], [0], [0], [1], [0, 0, 1, 1], [], []>} : vector<64x16xbf16>, vector<16x128xbf16>, vector<64x128xf32> -> vector<64x128xf32>
    %13 = arith.addf %9, %12 : vector<64x128xf32>
    %c0_8 = arith.constant 0 : index
    %c0_9 = arith.constant 0 : index
    %14 = vector.load %arg5[%c0_8, %c0_9] : memref<64x1xf32, #tpu.memory_space<vmem>>, vector<64x1xf32>
    %15 = vector.broadcast %14 : vector<64x1xf32> to vector<64x128xf32>
    %16 = arith.addf %13, %15 : vector<64x128xf32>
    %cst_10 = arith.constant 0.000000e+00 : f32
    %17 = vector.broadcast %cst_10 : f32 to vector<64x128xf32>
    %18 = arith.maximumf %16, %17 : vector<64x128xf32>
    %c0_11 = arith.constant 0 : index
    %c0_12 = arith.constant 0 : index
    %19 = vector.load %arg6[%c0_11, %c0_12] : memref<32x64xbf16, #tpu.memory_space<vmem>>, vector<32x64xbf16>
    %20 = arith.truncf %18 : vector<64x128xf32> to vector<64x128xbf16>
    %cst_13 = arith.constant dense<0.000000e+00> : vector<32x128xf32>
    %21 = tpu.matmul %19, %20, %cst_13 {dimension_numbers = #tpu.dot_dimension_numbers<[1], [0], [0], [1], [0, 0, 1, 1], [], []>} : vector<32x64xbf16>, vector<64x128xbf16>, vector<32x128xf32> -> vector<32x128xf32>
    %c0_14 = arith.constant 0 : index
    %c0_15 = arith.constant 0 : index
    %22 = vector.load %arg7[%c0_14, %c0_15] : memref<32x1xf32, #tpu.memory_space<vmem>>, vector<32x1xf32>
    %23 = vector.broadcast %22 : vector<32x1xf32> to vector<32x128xf32>
    %24 = arith.addf %21, %23 : vector<32x128xf32>
    %cst_16 = arith.constant 0.000000e+00 : f32
    %25 = vector.broadcast %cst_16 : f32 to vector<32x128xf32>
    %26 = arith.maximumf %24, %25 : vector<32x128xf32>
    %c0_17 = arith.constant 0 : index
    %c0_18 = arith.constant 0 : index
    %27 = vector.load %arg8[%c0_17, %c0_18] : memref<1x16xbf16, #tpu.memory_space<vmem>>, vector<1x16xbf16>
    %28 = arith.truncf %6 : vector<16x128xf32> to vector<16x128xbf16>
    %cst_19 = arith.constant dense<0.000000e+00> : vector<1x128xf32>
    %29 = tpu.matmul %27, %28, %cst_19 {dimension_numbers = #tpu.dot_dimension_numbers<[1], [0], [0], [1], [0, 0, 1, 1], [], []>} : vector<1x16xbf16>, vector<16x128xbf16>, vector<1x128xf32> -> vector<1x128xf32>
    %c0_20 = arith.constant 0 : index
    %c0_21 = arith.constant 0 : index
    %30 = vector.load %arg9[%c0_20, %c0_21] : memref<1x32xbf16, #tpu.memory_space<vmem>>, vector<1x32xbf16>
    %31 = arith.truncf %26 : vector<32x128xf32> to vector<32x128xbf16>
    %cst_22 = arith.constant dense<0.000000e+00> : vector<1x128xf32>
    %32 = tpu.matmul %30, %31, %cst_22 {dimension_numbers = #tpu.dot_dimension_numbers<[1], [0], [0], [1], [0, 0, 1, 1], [], []>} : vector<1x32xbf16>, vector<32x128xbf16>, vector<1x128xf32> -> vector<1x128xf32>
    %33 = arith.addf %29, %32 : vector<1x128xf32>
    %c0_23 = arith.constant 0 : index
    %c0_24 = arith.constant 0 : index
    %34 = vector.load %arg10[%c0_23, %c0_24] : memref<1x1xf32, #tpu.memory_space<vmem>>, vector<1x1xf32>
    %35 = vector.broadcast %34 : vector<1x1xf32> to vector<1x128xf32>
    %36 = arith.addf %33, %35 : vector<1x128xf32>
    %37 = vector.shape_cast %36 : vector<1x128xf32> to vector<1x1x128xf32>
    %c0_25 = arith.constant 0 : index
    %c0_26 = arith.constant 0 : index
    %c0_27 = arith.constant 0 : index
    %38 = vector.load %arg11[%c0_25, %c0_26, %c0_27] : memref<1x1x128xf32, #tpu.memory_space<vmem>>, vector<1x1x128xf32>
    tpu.vector_store %arg11[%c0_25, %c0_26, %c0_27], %37 {strides = array<i32>} : memref<1x1x128xf32, #tpu.memory_space<vmem>>, vector<1x1x128xf32>,
    return
  }
  func.func @transform_0(%arg0: i32) -> (i32, i32) {
    %c0_i32 = arith.constant 0 : i32
    %c0_i32_0 = arith.constant 0 : i32
    return %c0_i32, %arg0 : i32, i32
  }
  func.func @transform_1(%arg0: i32) -> (i32, i32) {
    %c0_i32 = arith.constant 0 : i32
    %c0_i32_0 = arith.constant 0 : i32
    return %c0_i32, %arg0 : i32, i32
  }
  func.func @transform_2(%arg0: i32) -> (i32, i32) {
    %c0_i32 = arith.constant 0 : i32
    %c0_i32_0 = arith.constant 0 : i32
    %c0_i32_1 = arith.constant 0 : i32
    return %c0_i32, %c0_i32_0 : i32, i32
  }
  func.func @transform_3(%arg0: i32) -> (i32, i32) {
    %c0_i32 = arith.constant 0 : i32
    %c0_i32_0 = arith.constant 0 : i32
    %c0_i32_1 = arith.constant 0 : i32
    return %c0_i32, %c0_i32_0 : i32, i32
  }
  func.func @transform_4(%arg0: i32) -> (i32, i32) {
    %c0_i32 = arith.constant 0 : i32
    %c0_i32_0 = arith.constant 0 : i32
    %c0_i32_1 = arith.constant 0 : i32
    return %c0_i32, %c0_i32_0 : i32, i32
  }
  func.func @transform_5(%arg0: i32) -> (i32, i32) {
    %c0_i32 = arith.constant 0 : i32
    %c0_i32_0 = arith.constant 0 : i32
    %c0_i32_1 = arith.constant 0 : i32
    return %c0_i32, %c0_i32_0 : i32, i32
  }
  func.func @transform_6(%arg0: i32) -> (i32, i32) {
    %c0_i32 = arith.constant 0 : i32
    %c0_i32_0 = arith.constant 0 : i32
    %c0_i32_1 = arith.constant 0 : i32
    return %c0_i32, %c0_i32_0 : i32, i32
  }
  func.func @transform_7(%arg0: i32) -> (i32, i32) {
    %c0_i32 = arith.constant 0 : i32
    %c0_i32_0 = arith.constant 0 : i32
    %c0_i32_1 = arith.constant 0 : i32
    return %c0_i32, %c0_i32_0 : i32, i32
  }
  func.func @transform_8(%arg0: i32) -> (i32, i32) {
    %c0_i32 = arith.constant 0 : i32
    %c0_i32_0 = arith.constant 0 : i32
    %c0_i32_1 = arith.constant 0 : i32
    return %c0_i32, %c0_i32_0 : i32, i32
  }
  func.func @transform_9(%arg0: i32) -> (i32, i32) {
    %c0_i32 = arith.constant 0 : i32
    %c0_i32_0 = arith.constant 0 : i32
    %c0_i32_1 = arith.constant 0 : i32
    return %c0_i32, %c0_i32_0 : i32, i32
  }
  func.func @transform_10(%arg0: i32) -> (i32, i32, i32) {
    %c0_i32 = arith.constant 0 : i32
    %c0_i32_0 = arith.constant 0 : i32
    %c0_i32_1 = arith.constant 0 : i32
    return %arg0, %c0_i32, %c0_i32_0 : i32, i32, i32
  }
}

</mosaic_0001>

<llo_original>
// kernel: neumf_forward.1
$region0: #{neumf_forward.1}
  #allocation0 [shape = 'u32[]', space=smem, size = 0x4, offset = 0x4, fixed_abs, tag = 'smem constant byte address 0x4 - core index']
  #allocation1 [shape = 'u32[144,128]{1,0:T(1,128)}', space=vmem, size = 0x12000, scoped, tag = 'internal scratch']
  #allocation2 [shape = 'f32[1,1]{1,0:T(1,128)S(1)}', space=vmem, size = 0x200, scoped, tag = 'scoped memory for neumf_forward.1']
  %s0 = inlined_call_operand.vmem [shape: bf16[32,128], index: 0, kind: input, shape index: {}]
  %s1 = inlined_call_operand.vmem [shape: bf16[32,128], index: 1, kind: input, shape index: {}]
  %s2 = inlined_call_operand.vmem [shape: bf16[64,16], index: 2, kind: input, shape index: {}]
  %s3 = inlined_call_operand.vmem [shape: bf16[64,16], index: 3, kind: input, shape index: {}]
  %s4 = inlined_call_operand.vmem [shape: f32[64,1], index: 4, kind: input, shape index: {}]
  %s5 = inlined_call_operand.vmem [shape: bf16[32,64], index: 5, kind: input, shape index: {}]
  %s6 = inlined_call_operand.vmem [shape: f32[32,1], index: 6, kind: input, shape index: {}]
  %s7 = inlined_call_operand.vmem [shape: bf16[1,16], index: 7, kind: input, shape index: {}]
  %s8 = inlined_call_operand.vmem [shape: bf16[1,32], index: 8, kind: input, shape index: {}]
  %s9 = inlined_call_operand.<no memory space> [shape: f32[1,1], index: 9, kind: input, shape index: {}]
  %s10 = inlined_call_operand.vmem [shape: f32[1,1,128], index: 10, kind: output, shape index: {}]
  %s11 = sld [smem:[#allocation0]]
  $region50: #{neumf_forward.1} parent=0
    _
  %s13 = ssub.s32 1, %s11
  %s14 = scalar_select 0, %s13, %s11
  %v15 = vstv %s9
  %16 = vst [vmem:[#allocation2] sm:$0x1] %v15
  // Predicated region
  $region2: #{neumf_forward.1} parent=0 // pred_check
    _
  $region3: #{neumf_forward.1} parent=0 // pred_check_branch
    %18 = sbr.rel (0) target = $region5
  $region4: #{neumf_forward.1} parent=0 // pred_region
    _
  $region5: #{neumf_forward.1} parent=0 // pred_fallthru
    _
  // Predicated region
  $region6: #{neumf_forward.1} parent=0 // pred_check
    _
  $region7: #{neumf_forward.1} parent=0 // pred_check_branch
    %20 = sbr.rel (0) target = $region9
  $region8: #{neumf_forward.1} parent=0 // pred_region
    _
  $region9: #{neumf_forward.1} parent=0 // pred_fallthru
    _
  // Predicated region
  $region10: #{neumf_forward.1} parent=0 // pred_check
    _
  $region11: #{neumf_forward.1} parent=0 // pred_check_branch
    %22 = sbr.rel (0) target = $region13
  $region12: #{neumf_forward.1} parent=0 // pred_region
    _
  $region13: #{neumf_forward.1} parent=0 // pred_fallthru
    _
  // Predicated region
  $region14: #{neumf_forward.1} parent=0 // pred_check
    _
  $region15: #{neumf_forward.1} parent=0 // pred_check_branch
    %24 = sbr.rel (0) target = $region17
  $region16: #{neumf_forward.1} parent=0 // pred_region
    _
  $region17: #{neumf_forward.1} parent=0 // pred_fallthru
    _
  // Predicated region
  $region18: #{neumf_forward.1} parent=0 // pred_check
    _
  $region19: #{neumf_forward.1} parent=0 // pred_check_branch
    %26 = sbr.rel (0) target = $region21
  $region20: #{neumf_forward.1} parent=0 // pred_region
    _
  $region21: #{neumf_forward.1} parent=0 // pred_fallthru
    _
  // Predicated region
  $region22: #{neumf_forward.1} parent=0 // pred_check
    _
  $region23: #{neumf_forward.1} parent=0 // pred_check_branch
    %28 = sbr.rel (0) target = $region25
  $region24: #{neumf_forward.1} parent=0 // pred_region
    _
  $region25: #{neumf_forward.1} parent=0 // pred_fallthru
    _
  // Predicated region
  $region26: #{neumf_forward.1} parent=0 // pred_check
    _
  $region27: #{neumf_forward.1} parent=0 // pred_check_branch
    %30 = sbr.rel (0) target = $region29
  $region28: #{neumf_forward.1} parent=0 // pred_region
    _
  $region29: #{neumf_forward.1} parent=0 // pred_fallthru
    _
  // Predicated region
  $region30: #{neumf_forward.1} parent=0 // pred_check
    _
  $region31: #{neumf_forward.1} parent=0 // pred_check_branch
    %32 = sbr.rel (0) target = $region33
  $region32: #{neumf_forward.1} parent=0 // pred_region
    _
  $region33: #{neumf_forward.1} parent=0 // pred_fallthru
    _
  // Predicated region
  $region34: #{neumf_forward.1} parent=0 // pred_check
    _
  $region35: #{neumf_forward.1} parent=0 // pred_check_branch
    %34 = sbr.rel (0) target = $region37
  $region36: #{neumf_forward.1} parent=0 // pred_region
    _
  $region37: #{neumf_forward.1} parent=0 // pred_fallthru
    _
  // Predicated region
  $region38: #{neumf_forward.1} parent=0 // pred_check
    _
  $region39: #{neumf_forward.1} parent=0 // pred_check_branch
    %36 = sbr.rel (0) target = $region41
  $region40: #{neumf_forward.1} parent=0 // pred_region
    _
  $region41: #{neumf_forward.1} parent=0 // pred_fallthru
    _
  %v38 = vld [vmem:[%s0] sm:$0xf]
  %v39 = vld [vmem:[%s0 + $0x4] sm:$0xf]
  %v40 = vld [vmem:[%s0 + $0x8] sm:$0xf]
  %v41 = vld [vmem:[%s0 + $0xc] sm:$0xf]
  %v42 = vld [vmem:[%s1] sm:$0xf]
  %v43 = vld [vmem:[%s1 + $0x4] sm:$0xf]
  %v44 = vld [vmem:[%s1 + $0x8] sm:$0xf]
  %v45 = vld [vmem:[%s1 + $0xc] sm:$0xf]
  %v46 = vunpack.c.l.bf16 %v38
  %v47 = vunpack.c.l.bf16 %v39
  %v48 = vunpack.c.l.bf16 %v42
  %v49 = vunpack.c.l.bf16 %v43
  %v50 = vmul.f32 %v46, %v48
  %v51 = vmul.f32 %v47, %v49
  %v52 = vld [vmem:[%s2] sm:$0xf]
  %v53 = vld [vmem:[%s2 + $0x4] sm:$0xf]
  %v54 = vld [vmem:[%s2 + $0x8] sm:$0xf]
  %v55 = vld [vmem:[%s2 + $0xc] sm:$0xf]
  %v56 = vld [vmem:[%s2 + $0x10] sm:$0xf]
  %v57 = vld [vmem:[%s2 + $0x14] sm:$0xf]
  %v58 = vld [vmem:[%s2 + $0x18] sm:$0xf]
  %v59 = vld [vmem:[%s2 + $0x1c] sm:$0xf]
  %v60 = vld [vmem:[%s3] sm:$0xf]
  %v61 = vld [vmem:[%s3 + $0x4] sm:$0xf]
  %v62 = vld [vmem:[%s3 + $0x8] sm:$0xf]
  %v63 = vld [vmem:[%s3 + $0xc] sm:$0xf]
  %v64 = vld [vmem:[%s3 + $0x10] sm:$0xf]
  %v65 = vld [vmem:[%s3 + $0x14] sm:$0xf]
  %v66 = vld [vmem:[%s3 + $0x18] sm:$0xf]
  %v67 = vld [vmem:[%s3 + $0x1c] sm:$0xf]
  %v76 = vunpack.c.l.b16 %v60
  %v77 = vunpack.c.l.b16 %v61
  %v78 = vunpack.c.l.b16 %v62
  %v79 = vunpack.c.l.b16 %v63
  %v80 = vunpack.c.l.b16 %v64
  %v81 = vunpack.c.l.b16 %v65
  %v82 = vunpack.c.l.b16 %v66
  %v83 = vunpack.c.l.b16 %v67
  %v84 = vpack.c.b16 %v77, %v76
  %v85 = vpack.c.b16 %v79, %v78
  %v86 = vpack.c.b16 %v81, %v80
  %v87 = vpack.c.b16 %v83, %v82
  %v90 = vunpack.c.l.b16 %v44
  %v91 = vunpack.c.l.b16 %v45
  %v92 = vpack.c.b16 %v91, %v90
  %vm94 = vcmask 130048
  %v96 = vsel %vm94, %v84, 0
  %v99 = vsel %vm94, %v85, 0
  %v102 = vsel %vm94, %v86, 0
  %v105 = vsel %vm94, %v87, 0
  %107 = vmatprep.subr.bf16.mxu0 0
  %108 = vmatpush1.bf16.msra.mxu0 %v92
  %109 = vmatprep.subr.bf16.mxu0 0
  %110 = vmatpush1.bf16.msra.mxu0 0
  %111 = vmatprep.subr.bf16.mxu0 0
  %112 = vmatpush1.bf16.msra.mxu0 0
  %113 = vmatprep.subr.bf16.mxu0 0
  %114 = vmatpush1.bf16.msra.mxu0 0
  %115 = vmatprep.subr.bf16.mxu0 0
  %116 = vmatpush1.bf16.msra.mxu0 0
  %117 = vmatprep.subr.bf16.mxu0 0
  %118 = vmatpush1.bf16.msra.mxu0 0
  %119 = vmatprep.subr.bf16.mxu0 0
  %120 = vmatpush1.bf16.msra.mxu0 0
  %121 = vmatprep.subr.bf16.mxu0 0
  %122 = vmatpush1.bf16.msra.mxu0 0
  %123 = vmatprep.subr.bf16.mxu0 0
  %124 = vmatpush1.bf16.msra.mxu0 0
  %125 = vmatprep.subr.bf16.mxu0 0
  %126 = vmatpush1.bf16.msra.mxu0 0
  %127 = vmatprep.subr.bf16.mxu0 0
  %128 = vmatpush1.bf16.msra.mxu0 0
  %129 = vmatprep.subr.bf16.mxu0 0
  %130 = vmatpush1.bf16.msra.mxu0 0
  %131 = vmatprep.subr.bf16.mxu0 0
  %132 = vmatpush1.bf16.msra.mxu0 0
  %133 = vmatprep.subr.bf16.mxu0 0
  %134 = vmatpush1.bf16.msra.mxu0 0
  %135 = vmatprep.subr.bf16.mxu0 0
  %136 = vmatpush1.bf16.msra.mxu0 0
  %137 = vmatprep.subr.bf16.mxu0 0
  %138 = vmatpush1.bf16.msra.mxu0 0
  %139 = vmatprep.mubr.bf16.mxu0 0
  %140 = vmatmul.mubr.bf16.gmra.mrb[0].mxu0 %v96
  %v141 = vpop.f32.mrb[0].mxu0
  %v142 = vadd.f32 0.0, %v141
  %v143 = vpop.f32.mrb[0].mxu0
  %v144 = vpop.f32.mrb[0].mxu0
  %v145 = vadd.f32 0.0, %v144
  %v146 = vpop.f32.mrb[0].mxu0
  %147 = vmatprep.mubr.bf16.mxu0 0
  %148 = vmatmul.mubr.bf16.gmra.mrb[0].mxu0 %v99
  %v149 = vpop.f32.mrb[0].mxu0
  %v150 = vadd.f32 0.0, %v149
  %v151 = vpop.f32.mrb[0].mxu0
  %v152 = vpop.f32.mrb[0].mxu0
  %v153 = vadd.f32 0.0, %v152
  %v154 = vpop.f32.mrb[0].mxu0
  %155 = vmatprep.mubr.bf16.mxu0 0
  %156 = vmatmul.mubr.bf16.gmra.mrb[0].mxu0 %v102
  %v157 = vpop.f32.mrb[0].mxu0
  %v158 = vadd.f32 0.0, %v157
  %v159 = vpop.f32.mrb[0].mxu0
  %v160 = vpop.f32.mrb[0].mxu0
  %v161 = vadd.f32 0.0, %v160
  %v162 = vpop.f32.mrb[0].mxu0
  %163 = vmatprep.mubr.bf16.mxu0 0
  %164 = vmatmul.mubr.bf16.gmra.mrb[0].mxu0 %v105
  %v165 = vpop.f32.mrb[0].mxu0
  %v166 = vadd.f32 0.0, %v165
  %v167 = vpop.f32.mrb[0].mxu0
  %v168 = vpop.f32.mrb[0].mxu0
  %v169 = vadd.f32 0.0, %v168
  %v170 = vpop.f32.mrb[0].mxu0
  %171 = vdwg.mxu0
  %v180 = vunpack.c.l.b16 %v52
  %v181 = vunpack.c.l.b16 %v53
  %v182 = vunpack.c.l.b16 %v54
  %v183 = vunpack.c.l.b16 %v55
  %v184 = vunpack.c.l.b16 %v56
  %v185 = vunpack.c.l.b16 %v57
  %v186 = vunpack.c.l.b16 %v58
  %v187 = vunpack.c.l.b16 %v59
  %v188 = vpack.c.b16 %v181, %v180
  %v189 = vpack.c.b16 %v183, %v182
  %v190 = vpack.c.b16 %v185, %v184
  %v191 = vpack.c.b16 %v187, %v186
  %v194 = vunpack.c.l.b16 %v40
  %v195 = vunpack.c.l.b16 %v41
  %v196 = vpack.c.b16 %v195, %v194
  %v199 = vsel %vm94, %v188, 0
  %v202 = vsel %vm94, %v189, 0
  %v205 = vsel %vm94, %v190, 0
  %v208 = vsel %vm94, %v191, 0
  %210 = vmatprep.subr.bf16.mxu0 0
  %211 = vmatpush1.bf16.msra.mxu0 %v196
  %212 = vmatprep.subr.bf16.mxu0 0
  %213 = vmatpush1.bf16.msra.mxu0 0
  %214 = vmatprep.subr.bf16.mxu0 0
  %215 = vmatpush1.bf16.msra.mxu0 0
  %216 = vmatprep.subr.bf16.mxu0 0
  %217 = vmatpush1.bf16.msra.mxu0 0
  %218 = vmatprep.subr.bf16.mxu0 0
  %219 = vmatpush1.bf16.msra.mxu0 0
  %220 = vmatprep.subr.bf16.mxu0 0
  %221 = vmatpush1.bf16.msra.mxu0 0
  %222 = vmatprep.subr.bf16.mxu0 0
  %223 = vmatpush1.bf16.msra.mxu0 0
  %224 = vmatprep.subr.bf16.mxu0 0
  %225 = vmatpush1.bf16.msra.mxu0 0
  %226 = vmatprep.subr.bf16.mxu0 0
  %227 = vmatpush1.bf16.msra.mxu0 0
  %228 = vmatprep.subr.bf16.mxu0 0
  %229 = vmatpush1.bf16.msra.mxu0 0
  %230 = vmatprep.subr.bf16.mxu0 0
  %231 = vmatpush1.bf16.msra.mxu0 0
  %232 = vmatprep.subr.bf16.mxu0 0
  %233 = vmatpush1.bf16.msra.mxu0 0
  %234 = vmatprep.subr.bf16.mxu0 0
  %235 = vmatpush1.bf16.msra.mxu0 0
  %236 = vmatprep.subr.bf16.mxu0 0
  %237 = vmatpush1.bf16.msra.mxu0 0
  %238 = vmatprep.subr.bf16.mxu0 0
  %239 = vmatpush1.bf16.msra.mxu0 0
  %240 = vmatprep.subr.bf16.mxu0 0
  %241 = vmatpush1.bf16.msra.mxu0 0
  %242 = vmatprep.mubr.bf16.mxu0 0
  %243 = vmatmul.mubr.bf16.gmra.mrb[0].mxu0 %v199
  %v244 = vpop.f32.mrb[0].mxu0
  %v245 = vadd.f32 %v142, %v244
  %v246 = vpop.f32.mrb[0].mxu0
  %v247 = vpop.f32.mrb[0].mxu0
  %v248 = vadd.f32 %v145, %v247
  %v249 = vpop.f32.mrb[0].mxu0
  %250 = vmatprep.mubr.bf16.mxu0 0
  %251 = vmatmul.mubr.bf16.gmra.mrb[0].mxu0 %v202
  %v252 = vpop.f32.mrb[0].mxu0
  %v253 = vadd.f32 %v150, %v252
  %v254 = vpop.f32.mrb[0].mxu0
  %v255 = vpop.f32.mrb[0].mxu0
  %v256 = vadd.f32 %v153, %v255
  %v257 = vpop.f32.mrb[0].mxu0
  %258 = vmatprep.mubr.bf16.mxu0 0
  %259 = vmatmul.mubr.bf16.gmra.mrb[0].mxu0 %v205
  %v260 = vpop.f32.mrb[0].mxu0
  %v261 = vadd.f32 %v158, %v260
  %v262 = vpop.f32.mrb[0].mxu0
  %v263 = vpop.f32.mrb[0].mxu0
  %v264 = vadd.f32 %v161, %v263
  %v265 = vpop.f32.mrb[0].mxu0
  %266 = vmatprep.mubr.bf16.mxu0 0
  %267 = vmatmul.mubr.bf16.gmra.mrb[0].mxu0 %v208
  %v268 = vpop.f32.mrb[0].mxu0
  %v269 = vadd.f32 %v166, %v268
  %v270 = vpop.f32.mrb[0].mxu0
  %v271 = vpop.f32.mrb[0].mxu0
  %v272 = vadd.f32 %v169, %v271
  %v273 = vpop.f32.mrb[0].mxu0
  %274 = vdwg.mxu0
  %v275 = vld [vmem:[%s4] sm:$0xff]
  %v276 = vld [vmem:[%s4 + $0x8] sm:$0xff]
  %v277 = vld [vmem:[%s4 + $0x10] sm:$0xff]
  %v278 = vld [vmem:[%s4 + $0x18] sm:$0xff]
  %v279 = vld [vmem:[%s4 + $0x20] sm:$0xff]
  %v280 = vld [vmem:[%s4 + $0x28] sm:$0xff]
  %v281 = vld [vmem:[%s4 + $0x30] sm:$0xff]
  %v282 = vld [vmem:[%s4 + $0x38] sm:$0xff]
  %284 = vset.pattern.permute.xlu0 0
  %285 = vperm.xlu0 %284, %v275
  %v286 = vpop.permute.xlu0 %285
  %289 = vset.pattern.permute.xlu0 0
  %290 = vperm.xlu0 %289, %v276
  %v291 = vpop.permute.xlu0 %290
  %294 = vset.pattern.permute.xlu0 0
  %295 = vperm.xlu0 %294, %v277
  %v296 = vpop.permute.xlu0 %295
  %299 = vset.pattern.permute.xlu0 0
  %300 = vperm.xlu0 %299, %v278
  %v301 = vpop.permute.xlu0 %300
  %304 = vset.pattern.permute.xlu0 0
  %305 = vperm.xlu0 %304, %v279
  %v306 = vpop.permute.xlu0 %305
  %309 = vset.pattern.permute.xlu0 0
  %310 = vperm.xlu0 %309, %v280
  %v311 = vpop.permute.xlu0 %310
  %314 = vset.pattern.permute.xlu0 0
  %315 = vperm.xlu0 %314, %v281
  %v316 = vpop.permute.xlu0 %315
  %319 = vset.pattern.permute.xlu0 0
  %320 = vperm.xlu0 %319, %v282
  %v321 = vpop.permute.xlu0 %320
  %v323 = vadd.f32 %v245, %v286
  %v324 = vadd.f32 %v248, %v291
  %v325 = vadd.f32 %v253, %v296
  %v326 = vadd.f32 %v256, %v301
  %v327 = vadd.f32 %v261, %v306
  %v328 = vadd.f32 %v264, %v311
  %v329 = vadd.f32 %v269, %v316
  %v330 = vadd.f32 %v272, %v321
  %v331 = vmax.f32 %v323, 0.0
  %v332 = vmax.f32 %v324, 0.0
  %v333 = vmax.f32 %v325, 0.0
  %v334 = vmax.f32 %v326, 0.0
  %v335 = vmax.f32 %v327, 0.0
  %v336 = vmax.f32 %v328, 0.0
  %v337 = vmax.f32 %v329, 0.0
  %v338 = vmax.f32 %v330, 0.0
  %v339 = vld [vmem:[%s5] sm:$0xf]
  %v340 = vld [vmem:[%s5 + $0x4] sm:$0xf]
  %v341 = vld [vmem:[%s5 + $0x8] sm:$0xf]
  %v342 = vld [vmem:[%s5 + $0xc] sm:$0xf]
  %v343 = vpack.c.bf16 %v332, %v331
  %v344 = vpack.c.bf16 %v334, %v333
  %v345 = vpack.c.bf16 %v336, %v335
  %v346 = vpack.c.bf16 %v338, %v337
  %v347 = vld [vmem:[%s6] sm:$0xff]
  %v348 = vld [vmem:[%s6 + $0x8] sm:$0xff]
  %v349 = vld [vmem:[%s6 + $0x10] sm:$0xff]
  %v350 = vld [vmem:[%s6 + $0x18] sm:$0xff]
  %352 = vset.pattern.permute.xlu0 0
  %353 = vperm.xlu0 %352, %v347
  %v354 = vpop.permute.xlu0 %353
  %357 = vset.pattern.permute.xlu0 0
  %358 = vperm.xlu0 %357, %v348
  %v359 = vpop.permute.xlu0 %358
  %362 = vset.pattern.permute.xlu0 0
  %363 = vperm.xlu0 %362, %v349
  %v364 = vpop.permute.xlu0 %363
  %367 = vset.pattern.permute.xlu0 0
  %368 = vperm.xlu0 %367, %v350
  %v369 = vpop.permute.xlu0 %368
  %v375 = vunpack.c.l.b16 %v339
  %v376 = vunpack.c.l.b16 %v340
  %v377 = vunpack.c.l.b16 %v341
  %v378 = vunpack.c.l.b16 %v342
  %v379 = vpack.c.b16 %v376, %v375
  %v380 = vpack.c.b16 %v378, %v377
  %vm381 = vcmask 523264
  %v383 = vsel %vm381, %v379, 0
  %v386 = vsel %vm381, %v380, 0
  %388 = vmatprep.subr.bf16.mxu0 0
  %389 = vmatpush1.bf16.msra.mxu0 %v343
  %390 = vmatprep.subr.bf16.mxu0 0
  %391 = vmatpush1.bf16.msra.mxu0 %v344
  %392 = vmatprep.subr.bf16.mxu0 0
  %393 = vmatpush1.bf16.msra.mxu0 %v345
  %394 = vmatprep.subr.bf16.mxu0 0
  %395 = vmatpush1.bf16.msra.mxu0 %v346
  %396 = vmatprep.subr.bf16.mxu0 0
  %397 = vmatpush1.bf16.msra.mxu0 0
  %398 = vmatprep.subr.bf16.mxu0 0
  %399 = vmatpush1.bf16.msra.mxu0 0
  %400 = vmatprep.subr.bf16.mxu0 0
  %401 = vmatpush1.bf16.msra.mxu0 0
  %402 = vmatprep.subr.bf16.mxu0 0
  %403 = vmatpush1.bf16.msra.mxu0 0
  %404 = vmatprep.subr.bf16.mxu0 0
  %405 = vmatpush1.bf16.msra.mxu0 0
  %406 = vmatprep.subr.bf16.mxu0 0
  %407 = vmatpush1.bf16.msra.mxu0 0
  %408 = vmatprep.subr.bf16.mxu0 0
  %409 = vmatpush1.bf16.msra.mxu0 0
  %410 = vmatprep.subr.bf16.mxu0 0
  %411 = vmatpush1.bf16.msra.mxu0 0
  %412 = vmatprep.subr.bf16.mxu0 0
  %413 = vmatpush1.bf16.msra.mxu0 0
  %414 = vmatprep.subr.bf16.mxu0 0
  %415 = vmatpush1.bf16.msra.mxu0 0
  %416 = vmatprep.subr.bf16.mxu0 0
  %417 = vmatpush1.bf16.msra.mxu0 0
  %418 = vmatprep.subr.bf16.mxu0 0
  %419 = vmatpush1.bf16.msra.mxu0 0
  %420 = vmatprep.mubr.bf16.mxu0 0
  %421 = vmatmul.mubr.bf16.gmra.mrb[0].mxu0 %v383
  %v422 = vpop.f32.mrb[0].mxu0
  %v423 = vadd.f32 %v354, %v422
  %v424 = vpop.f32.mrb[0].mxu0
  %v425 = vpop.f32.mrb[0].mxu0
  %v426 = vadd.f32 %v359, %v425
  %v427 = vpop.f32.mrb[0].mxu0
  %428 = vmatprep.mubr.bf16.mxu0 0
  %429 = vmatmul.mubr.bf16.gmra.mrb[0].mxu0 %v386
  %v430 = vpop.f32.mrb[0].mxu0
  %v431 = vadd.f32 %v364, %v430
  %v432 = vpop.f32.mrb[0].mxu0
  %v433 = vpop.f32.mrb[0].mxu0
  %v434 = vadd.f32 %v369, %v433
  %v435 = vpop.f32.mrb[0].mxu0
  %436 = vdwg.mxu0
  %v437 = vmax.f32 %v423, 0.0
  %v438 = vmax.f32 %v426, 0.0
  %v439 = vmax.f32 %v431, 0.0
  %v440 = vmax.f32 %v434, 0.0
  %v441 = vld [vmem:[%s7] sm:$0x1]
  %v442 = vpack.c.bf16 %v51, %v50
  %v443 = vld [vmem:[%s8] sm:$0x1]
  %v444 = vpack.c.bf16 %v438, %v437
  %v445 = vpack.c.bf16 %v440, %v439
  %vm446 = vcmask 261120
  %v448 = vsel %vm446, %v443, 0
  %450 = vmatprep.subr.bf16.mxu0 0
  %451 = vmatpush1.bf16.msra.mxu0 %v444
  %452 = vmatprep.subr.bf16.mxu0 0
  %453 = vmatpush1.bf16.msra.mxu0 %v445
  %454 = vmatprep.subr.bf16.mxu0 0
  %455 = vmatpush1.bf16.msra.mxu0 0
  %456 = vmatprep.subr.bf16.mxu0 0
  %457 = vmatpush1.bf16.msra.mxu0 0
  %458 = vmatprep.subr.bf16.mxu0 0
  %459 = vmatpush1.bf16.msra.mxu0 0
  %460 = vmatprep.subr.bf16.mxu0 0
  %461 = vmatpush1.bf16.msra.mxu0 0
  %462 = vmatprep.subr.bf16.mxu0 0
  %463 = vmatpush1.bf16.msra.mxu0 0
  %464 = vmatprep.subr.bf16.mxu0 0
  %465 = vmatpush1.bf16.msra.mxu0 0
  %466 = vmatprep.subr.bf16.mxu0 0
  %467 = vmatpush1.bf16.msra.mxu0 0
  %468 = vmatprep.subr.bf16.mxu0 0
  %469 = vmatpush1.bf16.msra.mxu0 0
  %470 = vmatprep.subr.bf16.mxu0 0
  %471 = vmatpush1.bf16.msra.mxu0 0
  %472 = vmatprep.subr.bf16.mxu0 0
  %473 = vmatpush1.bf16.msra.mxu0 0
  %474 = vmatprep.subr.bf16.mxu0 0
  %475 = vmatpush1.bf16.msra.mxu0 0
  %476 = vmatprep.subr.bf16.mxu0 0
  %477 = vmatpush1.bf16.msra.mxu0 0
  %478 = vmatprep.subr.bf16.mxu0 0
  %479 = vmatpush1.bf16.msra.mxu0 0
  %480 = vmatprep.subr.bf16.mxu0 0
  %481 = vmatpush1.bf16.msra.mxu0 0
  %482 = vmatprep.mubr.bf16.mxu0 0
  %483 = vmatmul.mubr.bf16.gmra.mrb[0].mxu0 %v448
  %v484 = vpop.f32.mrb[0].mxu0
  %v485 = vadd.f32 0.0, %v484
  %v486 = vpop.f32.mrb[0].mxu0
  %v487 = vpop.f32.mrb[0].mxu0
  %v488 = vpop.f32.mrb[0].mxu0
  %489 = vdwg.mxu0
  %v491 = vsel %vm94, %v441, 0
  %493 = vmatprep.subr.bf16.mxu0 0
  %494 = vmatpush1.bf16.msra.mxu0 %v442
  %495 = vmatprep.subr.bf16.mxu0 0
  %496 = vmatpush1.bf16.msra.mxu0 0
  %497 = vmatprep.subr.bf16.mxu0 0
  %498 = vmatpush1.bf16.msra.mxu0 0
  %499 = vmatprep.subr.bf16.mxu0 0
  %500 = vmatpush1.bf16.msra.mxu0 0
  %501 = vmatprep.subr.bf16.mxu0 0
  %502 = vmatpush1.bf16.msra.mxu0 0
  %503 = vmatprep.subr.bf16.mxu0 0
  %504 = vmatpush1.bf16.msra.mxu0 0
  %505 = vmatprep.subr.bf16.mxu0 0
  %506 = vmatpush1.bf16.msra.mxu0 0
  %507 = vmatprep.subr.bf16.mxu0 0
  %508 = vmatpush1.bf16.msra.mxu0 0
  %509 = vmatprep.subr.bf16.mxu0 0
  %510 = vmatpush1.bf16.msra.mxu0 0
  %511 = vmatprep.subr.bf16.mxu0 0
  %512 = vmatpush1.bf16.msra.mxu0 0
  %513 = vmatprep.subr.bf16.mxu0 0
  %514 = vmatpush1.bf16.msra.mxu0 0
  %515 = vmatprep.subr.bf16.mxu0 0
  %516 = vmatpush1.bf16.msra.mxu0 0
  %517 = vmatprep.subr.bf16.mxu0 0
  %518 = vmatpush1.bf16.msra.mxu0 0
  %519 = vmatprep.subr.bf16.mxu0 0
  %520 = vmatpush1.bf16.msra.mxu0 0
  %521 = vmatprep.subr.bf16.mxu0 0
  %522 = vmatpush1.bf16.msra.mxu0 0
  %523 = vmatprep.subr.bf16.mxu0 0
  %524 = vmatpush1.bf16.msra.mxu0 0
  %525 = vmatprep.mubr.bf16.mxu0 0
  %526 = vmatmul.mubr.bf16.gmra.mrb[0].mxu0 %v491
  %v527 = vpop.f32.mrb[0].mxu0
  %v528 = vadd.f32 %v485, %v527
  %v529 = vpop.f32.mrb[0].mxu0
  %v530 = vpop.f32.mrb[0].mxu0
  %v531 = vpop.f32.mrb[0].mxu0
  %532 = vdwg.mxu0
  %v533 = vld [vmem:[#allocation2] sm:$0x1]
  %535 = vset.pattern.permute.xlu0 0
  %536 = vperm.xlu0 %535, %v533
  %v537 = vpop.permute.xlu0 %536
  %v539 = vlaneseq
  %v540 = vshrl.u32 %v539, 7
  %v541 = vsub.s32 0, %v540
  %v542 = vrot.slane %v537, %v541
  %v543 = vadd.f32 %v528, %v542
  %544 = vst [vmem:[%s10] sm:$0x1] %v543
  // Predicated region
  $region42: #{neumf_forward.1} parent=0 // pred_check
    _
  $region43: #{neumf_forward.1} parent=0 // pred_check_branch
    %546 = sbr.rel (0) target = $region45
  $region44: #{neumf_forward.1} parent=0 // pred_region
    _
  $region45: #{neumf_forward.1} parent=0 // pred_fallthru
    _
  // Predicated region
  $region46: #{neumf_forward.1} parent=0 // pred_check
    _
  $region47: #{neumf_forward.1} parent=0 // pred_check_branch
    %548 = sbr.rel (0) target = $region49
  $region48: #{neumf_forward.1} parent=0 // pred_region
    _
  $region49: #{neumf_forward.1} parent=0 // pred_fallthru
    _

</llo_original>
